<compile_context>
chip_gen: v6e
topology: v6e:2x2x1
jax: 0.10.0
libtpu: 0.0.40
codegen_flags: <defaults>
</compile_context>

<pallas_src>
import jax
import jax.numpy as jnp
from jax import lax
from jax.experimental import pallas as pl
from jax.experimental.pallas import tpu as pltpu


_QB = 8                      # q rows moved per fori_loop step (one sublane tile)
_PALLAS_MIN_BYTES = 1 << 20  # below this per-batch slab size, use plain XLA


def _axial_swap_kernel(x_ref, o_ref):
    """o[0, q, p, :] = x[0, p, q, :] for one (batch, P-tile) block.

    x_ref: (1, TP, Q, d) VMEM block
    o_ref: (1, Q, TP, d) VMEM block
    """
    Q = x_ref.shape[2]
    num_full = Q // _QB
    rem = Q - num_full * _QB

    if num_full > 0:
        def body(qb, carry):
            q0 = pl.multiple_of(qb * _QB, _QB)
            chunk = x_ref[0, :, pl.ds(q0, _QB), :]      # (TP, 8, d) aligned load
            for j in range(_QB):                        # 8 lane-dense stores
                o_ref[0, q0 + j, :, :] = chunk[:, j, :]
            return carry
        lax.fori_loop(0, num_full, body, 0)

    # tail (< 8 rows), statically unrolled
    for j in range(rem):
        q = num_full * _QB + j
        o_ref[0, q, :, :] = x_ref[0, :, q, :]


def _choose_row_tile(P, row_bytes, target_bytes=2 << 20):
    """Pick a P-tile: a multiple of 8 that divides P (or P itself), ~2 MiB/tile."""
    if P <= 8 or P * row_bytes <= target_bytes:
        return P
    max_rows = int(max(8, target_bytes // row_bytes))
    tp = (min(P, max_rows) // 8) * 8
    while tp >= 8 and P % tp != 0:
        tp -= 8
    # TODO(synk): if P has no suitable multiple-of-8 divisor we fall back to the
    #             full slab instead of emitting padded partial output tiles.
    return tp if tp >= 8 else P


def _axial_swap_pallas(x4):
    """Swap the two middle axes of a (b, P, Q, d) array via Pallas."""
    b, P, Q, d = x4.shape
    itemsize = x4.dtype.itemsize
    tp = _choose_row_tile(P, Q * d * itemsize)
    grid = (b, P // tp)
    bytes_accessed = 2 * x4.size * itemsize  # read + write, zero flops

    return pl.pallas_call(
        _axial_swap_kernel,
        out_shape=jax.ShapeDtypeStruct((b, Q, P, d), x4.dtype),
        grid_spec=pltpu.PrefetchScalarGridSpec(
            num_scalar_prefetch=0,
            grid=grid,
            # Input block: last two dims equal the full (Q, d) extents -> legal.
            in_specs=[pl.BlockSpec((1, tp, Q, d), lambda i, p: (i, p, 0, 0))],
            # Output block: second-to-last dim tp is a multiple of 8 (or == P).
            out_specs=pl.BlockSpec((1, Q, tp, d), lambda i, p: (i, 0, p, 0)),
        ),
        compiler_params=pltpu.CompilerParams(
            dimension_semantics=("parallel", "parallel")),
        cost_estimate=pl.CostEstimate(
            flops=0, transcendentals=0, bytes_accessed=bytes_accessed),
    )(x4)


def _axial_swap(x4, use_pallas=None):
    """Axial middle-axes swap; dispatches to Pallas only when it pays off."""
    b, P, Q, d = x4.shape
    if use_pallas is None:
        slab_bytes = P * Q * d * x4.dtype.itemsize
        lane_dense = (d % 128 == 0)
        use_pallas = lane_dense and slab_bytes >= _PALLAS_MIN_BYTES
    if not use_pallas:
        return jnp.swapaxes(x4, 1, 2)
    return _axial_swap_pallas(x4)


def fold_axially(x, axial_dim, fn=None, input_mask=None, use_pallas=None, **kwargs):
    """JAX/Pallas equivalent of FoldAxially.forward.  x: (b, t, d)."""
    b, t, d = x.shape
    ax = axial_dim
    # TODO(synk): fairseq pads t up to a multiple of axial_dim upstream; like
    #             the reference module shown, we require divisibility here.
    assert t % ax == 0, "sequence length must be divisible by axial_dim"
    n = t // ax

    # fold: (b, t, d) -> (b*ax, n, d)  (reshapes are free; the swap is the kernel)
    folded = _axial_swap(x.reshape(b, n, ax, d), use_pallas).reshape(b * ax, n, d)

    mask = None
    if input_mask is not None:
        # mask fold: (b, t) -> (b*ax, n); tiny, plain jnp ops.
        mask = jnp.swapaxes(input_mask.reshape(b, n, ax), 1, 2).reshape(b * ax, n)

    if fn is None:
        # TODO(synk): identity stand-in for the wrapped attention module.
        fn = lambda y, input_mask=None, **kw: y
    y = fn(folded, input_mask=mask, **kwargs)

    # unfold: (b*ax, n, d) -> (b, t, d)
    out = _axial_swap(y.reshape(b, ax, n, d), use_pallas).reshape(b, t, d)
    return out


if __name__ == "__main__":
    key = jax.random.PRNGKey(0)

    batch, seq, dim, axial_dim = 2, 64, 128, 4   # d=128 -> lane-dense blocks
    n = seq // axial_dim

    x = jax.random.normal(key, (batch, seq, dim), jnp.float32)
    input_mask = jnp.ones((batch, seq), dtype=jnp.bool_)

    # Full module forward (fn = identity).  Force the Pallas path so the kernel
    # is exercised at these small demo shapes (auto-gate would route to XLA).
    y = fold_axially(x, axial_dim=axial_dim, input_mask=input_mask, use_pallas=True)
    y = jax.block_until_ready(y)
    assert y.shape == (batch, seq, dim)

    # 1) fold direction (Q = ax = 4 < 8: static tail path) matches reference
    fold_in = x.reshape(batch, n, axial_dim, dim)
    folded_kernel = _axial_swap_pallas(fold_in).reshape(batch * axial_dim, n, dim)
    folded_ref = jnp.swapaxes(fold_in, 1, 2).reshape(batch * axial_dim, n, dim)
    assert jnp.array_equal(jax.block_until_ready(folded_kernel), folded_ref)

    # 2) unfold direction (Q = n = 16 >= 8: fori_loop path) matches reference
    unfold_in = folded_ref.reshape(batch, axial_dim, n, dim)
    unfolded_kernel = _axial_swap_pallas(unfold_in).reshape(batch, seq, dim)
    unfolded_ref = jnp.swapaxes(unfold_in, 1, 2).reshape(batch, seq, dim)
    assert jnp.array_equal(jax.block_until_ready(unfolded_kernel), unfolded_ref)
    assert jnp.array_equal(unfolded_ref, x)

    # 3) with identity fn, FoldAxially round-trips to the identity
    assert jnp.array_equal(y, x)

    print("KERNEL_OK")
</pallas_src>

<mosaic_0001>
module attributes {stable_mosaic.version = 11 : i64} {
  func.func @_axial_swap_kernel(%arg0: i32, %arg1: i32, %arg2: memref<1x16x4x128xf32, #tpu.memory_space<vmem>>, %arg3: memref<1x4x16x128xf32, #tpu.memory_space<vmem>>) attributes {dimension_semantics = [#tpu.dimension_semantics<parallel>, #tpu.dimension_semantics<parallel>], iteration_bounds = array<i64: 2, 1>, scalar_prefetch = 0 : i64, scratch_operands = 0 : i64, tpu.core_type = #tpu.core_type<tc>, window_params = [{transform_indices = @transform_0, window_bounds = array<i64: 1, 16, 4, 128>}, {transform_indices = @transform_1, window_bounds = array<i64: 1, 4, 16, 128>}]} {
    %c0 = arith.constant 0 : index
    %c0_0 = arith.constant 0 : index
    %c0_1 = arith.constant 0 : index
    %c0_2 = arith.constant 0 : index
    %0 = vector.load %arg2[%c0, %c0_0, %c0_1, %c0_2] : memref<1x16x4x128xf32, #tpu.memory_space<vmem>>, vector<1x16x1x128xf32>
    %1 = vector.shape_cast %0 : vector<1x16x1x128xf32> to vector<16x128xf32>
    %c0_3 = arith.constant 0 : index
    %c0_4 = arith.constant 0 : index
    %c0_5 = arith.constant 0 : index
    %c0_6 = arith.constant 0 : index
    %2 = vector.load %arg3[%c0_3, %c0_4, %c0_5, %c0_6] : memref<1x4x16x128xf32, #tpu.memory_space<vmem>>, vector<1x1x16x128xf32>
    %3 = vector.shape_cast %2 : vector<1x1x16x128xf32> to vector<16x128xf32>
    %4 = vector.shape_cast %1 : vector<16x128xf32> to vector<1x1x16x128xf32>
    tpu.vector_store %arg3[%c0_3, %c0_4, %c0_5, %c0_6], %4 {strides = array<i32>} : memref<1x4x16x128xf32, #tpu.memory_space<vmem>>, vector<1x1x16x128xf32>,
    %c0_7 = arith.constant 0 : index
    %c0_8 = arith.constant 0 : index
    %c1 = arith.constant 1 : index
    %c0_9 = arith.constant 0 : index
    %5 = vector.load %arg2[%c0_7, %c0_8, %c1, %c0_9] : memref<1x16x4x128xf32, #tpu.memory_space<vmem>>, vector<1x16x1x128xf32>
    %6 = vector.shape_cast %5 : vector<1x16x1x128xf32> to vector<16x128xf32>
    %c0_10 = arith.constant 0 : index
    %c1_11 = arith.constant 1 : index
    %c0_12 = arith.constant 0 : index
    %c0_13 = arith.constant 0 : index
    %7 = vector.load %arg3[%c0_10, %c1_11, %c0_12, %c0_13] : memref<1x4x16x128xf32, #tpu.memory_space<vmem>>, vector<1x1x16x128xf32>
    %8 = vector.shape_cast %7 : vector<1x1x16x128xf32> to vector<16x128xf32>
    %9 = vector.shape_cast %6 : vector<16x128xf32> to vector<1x1x16x128xf32>
    tpu.vector_store %arg3[%c0_10, %c1_11, %c0_12, %c0_13], %9 {strides = array<i32>} : memref<1x4x16x128xf32, #tpu.memory_space<vmem>>, vector<1x1x16x128xf32>,
    %c0_14 = arith.constant 0 : index
    %c0_15 = arith.constant 0 : index
    %c2 = arith.constant 2 : index
    %c0_16 = arith.constant 0 : index
    %10 = vector.load %arg2[%c0_14, %c0_15, %c2, %c0_16] : memref<1x16x4x128xf32, #tpu.memory_space<vmem>>, vector<1x16x1x128xf32>
    %11 = vector.shape_cast %10 : vector<1x16x1x128xf32> to vector<16x128xf32>
    %c0_17 = arith.constant 0 : index
    %c2_18 = arith.constant 2 : index
    %c0_19 = arith.constant 0 : index
    %c0_20 = arith.constant 0 : index
    %12 = vector.load %arg3[%c0_17, %c2_18, %c0_19, %c0_20] : memref<1x4x16x128xf32, #tpu.memory_space<vmem>>, vector<1x1x16x128xf32>
    %13 = vector.shape_cast %12 : vector<1x1x16x128xf32> to vector<16x128xf32>
    %14 = vector.shape_cast %11 : vector<16x128xf32> to vector<1x1x16x128xf32>
    tpu.vector_store %arg3[%c0_17, %c2_18, %c0_19, %c0_20], %14 {strides = array<i32>} : memref<1x4x16x128xf32, #tpu.memory_space<vmem>>, vector<1x1x16x128xf32>,
    %c0_21 = arith.constant 0 : index
    %c0_22 = arith.constant 0 : index
    %c3 = arith.constant 3 : index
    %c0_23 = arith.constant 0 : index
    %15 = vector.load %arg2[%c0_21, %c0_22, %c3, %c0_23] : memref<1x16x4x128xf32, #tpu.memory_space<vmem>>, vector<1x16x1x128xf32>
    %16 = vector.shape_cast %15 : vector<1x16x1x128xf32> to vector<16x128xf32>
    %c0_24 = arith.constant 0 : index
    %c3_25 = arith.constant 3 : index
    %c0_26 = arith.constant 0 : index
    %c0_27 = arith.constant 0 : index
    %17 = vector.load %arg3[%c0_24, %c3_25, %c0_26, %c0_27] : memref<1x4x16x128xf32, #tpu.memory_space<vmem>>, vector<1x1x16x128xf32>
    %18 = vector.shape_cast %17 : vector<1x1x16x128xf32> to vector<16x128xf32>
    %19 = vector.shape_cast %16 : vector<16x128xf32> to vector<1x1x16x128xf32>
    tpu.vector_store %arg3[%c0_24, %c3_25, %c0_26, %c0_27], %19 {strides = array<i32>} : memref<1x4x16x128xf32, #tpu.memory_space<vmem>>, vector<1x1x16x128xf32>,
    return
  }
  func.func @transform_0(%arg0: i32, %arg1: i32) -> (i32, i32, i32, i32) {
    %c0_i32 = arith.constant 0 : i32
    %c0_i32_0 = arith.constant 0 : i32
    %c0_i32_1 = arith.constant 0 : i32
    return %arg0, %arg1, %c0_i32, %c0_i32_0 : i32, i32, i32, i32
  }
  func.func @transform_1(%arg0: i32, %arg1: i32) -> (i32, i32, i32, i32) {
    %c0_i32 = arith.constant 0 : i32
    %c0_i32_0 = arith.constant 0 : i32
    %c0_i32_1 = arith.constant 0 : i32
    return %arg0, %c0_i32, %arg1, %c0_i32_0 : i32, i32, i32, i32
  }
}

</mosaic_0001>

<llo_original>
// kernel: tpu_custom_call.1
$region0: #{tpu_custom_call.1}
  #allocation0 [shape = 'u32[]', space=smem, size = 0x4, offset = 0x4, fixed_abs, tag = 'smem constant byte address 0x4 - core index']
  #allocation1 [shape = 'u32[144,128]{1,0:T(1,128)}', space=vmem, size = 0x12000, scoped, tag = 'internal scratch']
  %s0 = inlined_call_operand.hbm [shape: f32[2,16,4,128], index: 0, kind: input, shape index: {}]
  %s1 = inlined_call_operand.hbm [shape: f32[2,4,16,128], index: 1, kind: output, shape index: {}]
  %s2 = sld [smem:[#allocation0]]
  $region41: #{tpu_custom_call.1} parent=0
    _
  %s4 = ssub.s32 1, %s2
  %s5 = scalar_select 0, %s4, %s2
  $region1: #{tpu_custom_call.1} parent=0
    #allocation2 [shape = 'u8[65536]{0}', space=vmem, size = 0x10000, scoped, tag = 'input window, operand 0']
    #allocation3 [shape = 's32[2]{0}', space=sflag, size = 0x8, scoped, tag = 'scoped memory for tpu_custom_call.1']
    #allocation4 [shape = 's32[2]{0}', space=sflag, size = 0x8, scoped, tag = 'scoped memory for tpu_custom_call.1']
    #allocation5 [shape = 'u8[65536]{0}', space=vmem, size = 0x10000, scoped, tag = 'output window, operand 0']
    %6 = vsyncpa [#allocation3], 0
    %s7 = scalar_lea.sflag [#allocation3], 1
    %8 = vsyncpa %s7, 0
    %9 = vsyncpa [#allocation4], 0
    %s10 = scalar_lea.sflag [#allocation4], 1
    %11 = vsyncpa %s10, 0
    loop: start=0, step=1, limit=4
    $region2: #{tpu_custom_call.1} parent=1 // loop_pre_header
      _
    $region3: #{tpu_custom_call.1} parent=1 // loop_header
      %s13 = sphi 0, %s17
      %p14 = scmp.ge.s32.totalorder %s13, 4
      %s20 = sphi 0, %s32
      %s21 = sphi 0, %s28
      %s22 = sphi 0, %s20
      %s23 = sphi 0, %s21
      %s24 = sphi 0, %s22
      %s25 = sphi 0, %s23
      %s37 = sphi 0, %s39
      %s40 = sphi 0, %s37
      %s41 = sphi 0, %s40
      %s57 = sphi 0, %s41
      %s65 = sphi 0, %s67
      %s68 = sphi 0, %s65
      %s69 = sphi 0, %s68
      %s85 = sphi 0, %s69
    $region4: #{tpu_custom_call.1} parent=1 // loop_header_branch
      %16 = sbr.rel (%p14) target = $region8
    $region5: #{tpu_custom_call.1} parent=1 // loop_body
      %s18 = ssub.s32 %s13, 1
      %s19 = ssub.s32 %s13, 2
      %s26 = sadd.s32 1, %s21
      %p27 = scmp.ge.s32.totalorder %s26, 1
      %s28 = scalar_select %p27, 0, %s26
      %s29 = sadd.s32 1, %s20
      %s30 = scalar_select %p27, %s29, %s20
      %p31 = scmp.ge.s32.totalorder %s30, 2
      %s32 = scalar_select %p31, 0, %s30
      %s33 = ssub.s32 %s20, %s32
      %s34 = ssub.s32 %s21, %s28
      %s35 = sor.u32 %s33, %s34
      %p36 = scmp.eq.s32.totalorder %s35, 0
      %s38 = sadd.s32 %s37, 1
      %s39 = scalar_select %p36, %s37, %s38
      %p42 = pneg %p36
      %p43 = scmp.eq.s32.totalorder %s13, 1
      %p44 = por %p42, %p43
      %p45 = scmp.ne.s32.totalorder %s37, %s40
      %p46 = scmp.eq.s32.totalorder %s13, 0
      %p47 = por %p45, %p46
      %p48 = scmp.ne.s32.totalorder %s37, %s40
      %p49 = scmp.eq.s32.totalorder %s18, 1
      %p50 = por %p48, %p49
      %p51 = scmp.ne.s32.totalorder %s40, %s41
      %p52 = scmp.eq.s32.totalorder %s18, 0
      %p53 = por %p51, %p52
      %p54 = scmp.ne.s32.totalorder %s40, %s41
      %p55 = scmp.eq.s32.totalorder %s19, 1
      %p56 = por %p54, %p55
      %p58 = scmp.ne.s32.totalorder %s41, %s57
      %p59 = scmp.eq.s32.totalorder %s19, 0
      %p60 = por %p58, %p59
      %s61 = ssub.s32 %s20, %s32
      %s62 = ssub.s32 %s21, %s28
      %s63 = sor.u32 %s61, %s62
      %p64 = scmp.eq.s32.totalorder %s63, 0
      %s66 = sadd.s32 %s65, 1
      %s67 = scalar_select %p64, %s65, %s66
      %p70 = pneg %p64
      %p71 = scmp.eq.s32.totalorder %s13, 1
      %p72 = por %p70, %p71
      %p73 = scmp.ne.s32.totalorder %s65, %s68
      %p74 = scmp.eq.s32.totalorder %s13, 0
      %p75 = por %p73, %p74
      %p76 = scmp.ne.s32.totalorder %s65, %s68
      %p77 = scmp.eq.s32.totalorder %s18, 1
      %p78 = por %p76, %p77
      %p79 = scmp.ne.s32.totalorder %s68, %s69
      %p80 = scmp.eq.s32.totalorder %s18, 0
      %p81 = por %p79, %p80
      %p82 = scmp.ne.s32.totalorder %s68, %s69
      %p83 = scmp.eq.s32.totalorder %s19, 1
      %p84 = por %p82, %p83
      %p86 = scmp.ne.s32.totalorder %s69, %s85
      %p87 = scmp.eq.s32.totalorder %s19, 0
      %p88 = por %p86, %p87
      %p89 = scmp.le.s32.totalorder 1, %s13
      %p90 = scmp.lt.s32.totalorder %s13, 3
      %p91 = pnand %p89, %p90
      %p92 = pneg %p91
      // Predicated region
      $region9: #{tpu_custom_call.1} parent=5 // pred_check
        _
      $region10: #{tpu_custom_call.1} parent=5 // pred_check_branch
        %94 = sbr.rel (%p91) target = $region12
      $region11: #{tpu_custom_call.1} parent=5 // pred_region
        %s95 = ssub.s32 %s13, 1
      $region12: #{tpu_custom_call.1} parent=5 // pred_fallthru
        _
      %p96 = scmp.lt.s32.totalorder %s13, 2
      // Predicated region
      $region13: #{tpu_custom_call.1} parent=5 // pred_check
        %p97 = pneg %p96
      $region14: #{tpu_custom_call.1} parent=5 // pred_check_branch
        %99 = sbr.rel (%p97) target = $region16
      $region15: #{tpu_custom_call.1} parent=5 // pred_region
        // Predicated region
        $region17: #{tpu_custom_call.1} parent=15 // pred_check
          %p100 = pneg %p47
        $region18: #{tpu_custom_call.1} parent=15 // pred_check_branch
          %102 = sbr.rel (%p100) target = $region20
        $region19: #{tpu_custom_call.1} parent=15 // pred_region
          %s103 = sand.u32 %s37, 1
          %s104 = scalar_lea.sflag [#allocation3], %s103
          %s105 = sand.u32 %s37, 1
          %s106 = smul.addr %s105, 64
          %s107 = scalar_lea.vmem [#allocation2], %s106
          %s108 = smul.u32 16, %s21
          %s110 = ssub.s32 1024, 1024
          %111 = vsyncadd %s104, %s110
          %s112 = smul.addr %s20, 16
          %s113 = sadd.s32 %s108, %s112
          %s114 = smul.addr %s113, 64
          %s115 = scalar_lea.hbm %s0, %s114
          %s116 = sshll.u32 %s107, 4
          %s117 = int_to_ptr.vmem [resolvable:$true] %s116
          %122 = dma.hbm_to_vmem [thread:$0]  %s115, 1024, %s117, %s104, 64, 64, 4
        $region20: #{tpu_custom_call.1} parent=15 // pred_fallthru
          _
      $region16: #{tpu_custom_call.1} parent=5 // pred_fallthru
        _
      %p123 = scmp.le.s32.totalorder 1, %s13
      %p124 = scmp.lt.s32.totalorder %s13, 3
      %p125 = pnand %p123, %p124
      %p126 = pneg %p125
      // Predicated region
      $region21: #{tpu_custom_call.1} parent=5 // pred_check
        _
      $region22: #{tpu_custom_call.1} parent=5 // pred_check_branch
        %128 = sbr.rel (%p125) target = $region24
      $region23: #{tpu_custom_call.1} parent=5 // pred_region
        %s129 = ssub.s32 %s13, 1
        %s130 = sand.u32 %s40, 1
        %s131 = scalar_lea.sflag [#allocation3], %s130
        %s132 = sand.u32 %s40, 1
        %s133 = smul.addr %s132, 64
        %s134 = scalar_lea.vmem [#allocation2], %s133
        // Predicated region
        $region25: #{tpu_custom_call.1} parent=23 // pred_check
          %p135 = pneg %p53
        $region26: #{tpu_custom_call.1} parent=23 // pred_check_branch
          %137 = sbr.rel (%p135) target = $region28
        $region27: #{tpu_custom_call.1} parent=23 // pred_region
          %138 = dma.done %s131, 1024
        $region28: #{tpu_custom_call.1} parent=23 // pred_fallthru
          _
        %s139 = sand.u32 %s40, 1
        %s140 = scalar_lea.sflag [#allocation3], %s139
        %s141 = sand.u32 %s40, 1
        %s142 = smul.addr %s141, 64
        %s143 = scalar_lea.vmem [#allocation2], %s142
        %p144 = pneg %p53
        %p145 = pneg %p50
        %p146 = pneg %p81
        %p147 = pneg %p78
        %s148 = sand.u32 %s68, 1
        %s149 = scalar_lea.sflag [#allocation4], %s148
        %s150 = sand.u32 %s68, 1
        %s151 = smul.addr %s150, 64
        %s152 = scalar_lea.vmem [#allocation5], %s151
        %s153 = smul.u32 16, %s23
        %s154 = smul.u32 2, %s23
        %v155 = vld [vmem:[%s134] sm:$0x1]
        %v156 = vld [vmem:[%s134 + $0x4] sm:$0x1]
        %v157 = vld [vmem:[%s134 + $0x8] sm:$0x1]
        %v158 = vld [vmem:[%s134 + $0xc] sm:$0x1]
        %v159 = vld [vmem:[%s134 + $0x10] sm:$0x1]
        %v160 = vld [vmem:[%s134 + $0x14] sm:$0x1]
        %v161 = vld [vmem:[%s134 + $0x18] sm:$0x1]
        %v162 = vld [vmem:[%s134 + $0x1c] sm:$0x1]
        %v163 = vld [vmem:[%s134 + $0x20] sm:$0x1]
        %v164 = vld [vmem:[%s134 + $0x24] sm:$0x1]
        %v165 = vld [vmem:[%s134 + $0x28] sm:$0x1]
        %v166 = vld [vmem:[%s134 + $0x2c] sm:$0x1]
        %v167 = vld [vmem:[%s134 + $0x30] sm:$0x1]
        %v168 = vld [vmem:[%s134 + $0x34] sm:$0x1]
        %v169 = vld [vmem:[%s134 + $0x38] sm:$0x1]
        %v170 = vld [vmem:[%s134 + $0x3c] sm:$0x1]
        %v187 = vrot.slane %v156, 7
        %vm188 = vcmask 1041409
        %v189 = vsel %vm188, %v187, %v155
        %v190 = vrot.slane %v157, 6
        %vm191 = vcmask 1042434
        %v192 = vsel %vm191, %v190, %v189
        %v193 = vrot.slane %v158, 5
        %vm194 = vcmask 1043459
        %v195 = vsel %vm194, %v193, %v192
        %v196 = vrot.slane %v159, 4
        %vm197 = vcmask 1044484
        %v198 = vsel %vm197, %v196, %v195
        %v199 = vrot.slane %v160, 3
        %vm200 = vcmask 1045509
        %v201 = vsel %vm200, %v199, %v198
        %v202 = vrot.slane %v161, 2
        %vm203 = vcmask 1046534
        %v204 = vsel %vm203, %v202, %v201
        %v205 = vrot.slane %v162, 1
        %vm206 = vcmask 1047559
        %v207 = vsel %vm206, %v205, %v204
        %v208 = vrot.slane %v164, 7
        %v209 = vsel %vm188, %v208, %v163
        %v210 = vrot.slane %v165, 6
        %v211 = vsel %vm191, %v210, %v209
        %v212 = vrot.slane %v166, 5
        %v213 = vsel %vm194, %v212, %v211
        %v214 = vrot.slane %v167, 4
        %v215 = vsel %vm197, %v214, %v213
        %v216 = vrot.slane %v168, 3
        %v217 = vsel %vm200, %v216, %v215
        %v218 = vrot.slane %v169, 2
        %v219 = vsel %vm203, %v218, %v217
        %v220 = vrot.slane %v170, 1
        %v221 = vsel %vm206, %v220, %v219
        %224 = vst [vmem:[%s152] sm:$0xff] %v207
        %225 = vst [vmem:[%s152 + $0x8] sm:$0xff] %v221
        %v226 = vld [vmem:[%s134 + $0x1] sm:$0x1]
        %v227 = vld [vmem:[%s134 + $0x5] sm:$0x1]
        %v228 = vld [vmem:[%s134 + $0x9] sm:$0x1]
        %v229 = vld [vmem:[%s134 + $0xd] sm:$0x1]
        %v230 = vld [vmem:[%s134 + $0x11] sm:$0x1]
        %v231 = vld [vmem:[%s134 + $0x15] sm:$0x1]
        %v232 = vld [vmem:[%s134 + $0x19] sm:$0x1]
        %v233 = vld [vmem:[%s134 + $0x1d] sm:$0x1]
        %v234 = vld [vmem:[%s134 + $0x21] sm:$0x1]
        %v235 = vld [vmem:[%s134 + $0x25] sm:$0x1]
        %v236 = vld [vmem:[%s134 + $0x29] sm:$0x1]
        %v237 = vld [vmem:[%s134 + $0x2d] sm:$0x1]
        %v238 = vld [vmem:[%s134 + $0x31] sm:$0x1]
        %v239 = vld [vmem:[%s134 + $0x35] sm:$0x1]
        %v240 = vld [vmem:[%s134 + $0x39] sm:$0x1]
        %v241 = vld [vmem:[%s134 + $0x3d] sm:$0x1]
        %v258 = vrot.slane %v227, 7
        %v259 = vsel %vm188, %v258, %v226
        %v260 = vrot.slane %v228, 6
        %v261 = vsel %vm191, %v260, %v259
        %v262 = vrot.slane %v229, 5
        %v263 = vsel %vm194, %v262, %v261
        %v264 = vrot.slane %v230, 4
        %v265 = vsel %vm197, %v264, %v263
        %v266 = vrot.slane %v231, 3
        %v267 = vsel %vm200, %v266, %v265
        %v268 = vrot.slane %v232, 2
        %v269 = vsel %vm203, %v268, %v267
        %v270 = vrot.slane %v233, 1
        %v271 = vsel %vm206, %v270, %v269
        %v272 = vrot.slane %v235, 7
        %v273 = vsel %vm188, %v272, %v234
        %v274 = vrot.slane %v236, 6
        %v275 = vsel %vm191, %v274, %v273
        %v276 = vrot.slane %v237, 5
        %v277 = vsel %vm194, %v276, %v275
        %v278 = vrot.slane %v238, 4
        %v279 = vsel %vm197, %v278, %v277
        %v280 = vrot.slane %v239, 3
        %v281 = vsel %vm200, %v280, %v279
        %v282 = vrot.slane %v240, 2
        %v283 = vsel %vm203, %v282, %v281
        %v284 = vrot.slane %v241, 1
        %v285 = vsel %vm206, %v284, %v283
        %s288 = scalar_lea.vmem %s152, 16 [#allocation5]
        %289 = vst [vmem:[%s288] sm:$0xff] %v271
        %290 = vst [vmem:[%s288 + $0x8] sm:$0xff] %v285
        %v291 = vld [vmem:[%s134 + $0x2] sm:$0x1]
        %v292 = vld [vmem:[%s134 + $0x6] sm:$0x1]
        %v293 = vld [vmem:[%s134 + $0xa] sm:$0x1]
        %v294 = vld [vmem:[%s134 + $0xe] sm:$0x1]
        %v295 = vld [vmem:[%s134 + $0x12] sm:$0x1]
        %v296 = vld [vmem:[%s134 + $0x16] sm:$0x1]
        %v297 = vld [vmem:[%s134 + $0x1a] sm:$0x1]
        %v298 = vld [vmem:[%s134 + $0x1e] sm:$0x1]
        %v299 = vld [vmem:[%s134 + $0x22] sm:$0x1]
        %v300 = vld [vmem:[%s134 + $0x26] sm:$0x1]
        %v301 = vld [vmem:[%s134 + $0x2a] sm:$0x1]
        %v302 = vld [vmem:[%s134 + $0x2e] sm:$0x1]
        %v303 = vld [vmem:[%s134 + $0x32] sm:$0x1]
        %v304 = vld [vmem:[%s134 + $0x36] sm:$0x1]
        %v305 = vld [vmem:[%s134 + $0x3a] sm:$0x1]
        %v306 = vld [vmem:[%s134 + $0x3e] sm:$0x1]
        %v323 = vrot.slane %v292, 7
        %v324 = vsel %vm188, %v323, %v291
        %v325 = vrot.slane %v293, 6
        %v326 = vsel %vm191, %v325, %v324
        %v327 = vrot.slane %v294, 5
        %v328 = vsel %vm194, %v327, %v326
        %v329 = vrot.slane %v295, 4
        %v330 = vsel %vm197, %v329, %v328
        %v331 = vrot.slane %v296, 3
        %v332 = vsel %vm200, %v331, %v330
        %v333 = vrot.slane %v297, 2
        %v334 = vsel %vm203, %v333, %v332
        %v335 = vrot.slane %v298, 1
        %v336 = vsel %vm206, %v335, %v334
        %v337 = vrot.slane %v300, 7
        %v338 = vsel %vm188, %v337, %v299
        %v339 = vrot.slane %v301, 6
        %v340 = vsel %vm191, %v339, %v338
        %v341 = vrot.slane %v302, 5
        %v342 = vsel %vm194, %v341, %v340
        %v343 = vrot.slane %v303, 4
        %v344 = vsel %vm197, %v343, %v342
        %v345 = vrot.slane %v304, 3
        %v346 = vsel %vm200, %v345, %v344
        %v347 = vrot.slane %v305, 2
        %v348 = vsel %vm203, %v347, %v346
        %v349 = vrot.slane %v306, 1
        %v350 = vsel %vm206, %v349, %v348
        %s353 = scalar_lea.vmem %s152, 32 [#allocation5]
        %354 = vst [vmem:[%s353] sm:$0xff] %v336
        %355 = vst [vmem:[%s353 + $0x8] sm:$0xff] %v350
        %v356 = vld [vmem:[%s134 + $0x3] sm:$0x1]
        %v357 = vld [vmem:[%s134 + $0x7] sm:$0x1]
        %v358 = vld [vmem:[%s134 + $0xb] sm:$0x1]
        %v359 = vld [vmem:[%s134 + $0xf] sm:$0x1]
        %v360 = vld [vmem:[%s134 + $0x13] sm:$0x1]
        %v361 = vld [vmem:[%s134 + $0x17] sm:$0x1]
        %v362 = vld [vmem:[%s134 + $0x1b] sm:$0x1]
        %v363 = vld [vmem:[%s134 + $0x1f] sm:$0x1]
        %v364 = vld [vmem:[%s134 + $0x23] sm:$0x1]
        %v365 = vld [vmem:[%s134 + $0x27] sm:$0x1]
        %v366 = vld [vmem:[%s134 + $0x2b] sm:$0x1]
        %v367 = vld [vmem:[%s134 + $0x2f] sm:$0x1]
        %v368 = vld [vmem:[%s134 + $0x33] sm:$0x1]
        %v369 = vld [vmem:[%s134 + $0x37] sm:$0x1]
        %v370 = vld [vmem:[%s134 + $0x3b] sm:$0x1]
        %v371 = vld [vmem:[%s134 + $0x3f] sm:$0x1]
        %v388 = vrot.slane %v357, 7
        %v389 = vsel %vm188, %v388, %v356
        %v390 = vrot.slane %v358, 6
        %v391 = vsel %vm191, %v390, %v389
        %v392 = vrot.slane %v359, 5
        %v393 = vsel %vm194, %v392, %v391
        %v394 = vrot.slane %v360, 4
        %v395 = vsel %vm197, %v394, %v393
        %v396 = vrot.slane %v361, 3
        %v397 = vsel %vm200, %v396, %v395
        %v398 = vrot.slane %v362, 2
        %v399 = vsel %vm203, %v398, %v397
        %v400 = vrot.slane %v363, 1
        %v401 = vsel %vm206, %v400, %v399
        %v402 = vrot.slane %v365, 7
        %v403 = vsel %vm188, %v402, %v364
        %v404 = vrot.slane %v366, 6
        %v405 = vsel %vm191, %v404, %v403
        %v406 = vrot.slane %v367, 5
        %v407 = vsel %vm194, %v406, %v405
        %v408 = vrot.slane %v368, 4
        %v409 = vsel %vm197, %v408, %v407
        %v410 = vrot.slane %v369, 3
        %v411 = vsel %vm200, %v410, %v409
        %v412 = vrot.slane %v370, 2
        %v413 = vsel %vm203, %v412, %v411
        %v414 = vrot.slane %v371, 1
        %v415 = vsel %vm206, %v414, %v413
        %s418 = scalar_lea.vmem %s152, 48 [#allocation5]
        %419 = vst [vmem:[%s418] sm:$0xff] %v401
        %420 = vst [vmem:[%s418 + $0x8] sm:$0xff] %v415
        %s421 = sand.u32 %s68, 1
        %s422 = scalar_lea.sflag [#allocation4], %s421
        %s423 = sand.u32 %s68, 1
        %s424 = smul.addr %s423, 64
        %s425 = scalar_lea.vmem [#allocation5], %s424
        // Predicated region
        $region29: #{tpu_custom_call.1} parent=23 // pred_check
          %p426 = pneg %p78
        $region30: #{tpu_custom_call.1} parent=23 // pred_check_branch
          %428 = sbr.rel (%p426) target = $region32
        $region31: #{tpu_custom_call.1} parent=23 // pred_region
          %s429 = smul.u32 2, %s23
          %s431 = ssub.s32 1024, 1024
          %432 = vsyncadd %s422, %s431
          %s433 = smul.addr %s22, 8
          %s434 = sadd.s32 %s429, %s433
          %s435 = smul.addr %s434, 128
          %s436 = scalar_lea.hbm %s1, %s435
          %s437 = sshll.u32 %s425, 4
          %s438 = int_to_ptr.vmem [resolvable:$true] %s437
          %443 = dma.vmem_to_hbm [thread:$0]  %s438, 1024, %s436, %s422, 128, 128, 8
        $region32: #{tpu_custom_call.1} parent=23 // pred_fallthru
          _
      $region24: #{tpu_custom_call.1} parent=5 // pred_fallthru
        _
      %p444 = scmp.le.s32.totalorder 2, %s13
      // Predicated region
      $region33: #{tpu_custom_call.1} parent=5 // pred_check
        %p445 = pneg %p444
      $region34: #{tpu_custom_call.1} parent=5 // pred_check_branch
        %447 = sbr.rel (%p445) target = $region36
      $region35: #{tpu_custom_call.1} parent=5 // pred_region
        %s448 = ssub.s32 %s13, 2
        // Predicated region
        $region37: #{tpu_custom_call.1} parent=35 // pred_check
          %p449 = pneg %p84
        $region38: #{tpu_custom_call.1} parent=35 // pred_check_branch
          %451 = sbr.rel (%p449) target = $region40
        $region39: #{tpu_custom_call.1} parent=35 // pred_region
          %s452 = sand.u32 %s69, 1
          %s453 = scalar_lea.sflag [#allocation4], %s452
          %s454 = sand.u32 %s69, 1
          %s455 = smul.addr %s454, 64
          %s456 = scalar_lea.vmem [#allocation5], %s455
          %457 = dma.done %s453, 1024
        $region40: #{tpu_custom_call.1} parent=35 // pred_fallthru
          _
      $region36: #{tpu_custom_call.1} parent=5 // pred_fallthru
        _
    $region6: #{tpu_custom_call.1} parent=1 // loop_footer
      %s17 = sadd.s32 1, %s13
    $region7: #{tpu_custom_call.1} parent=1 // loop_footer_branch
      %12 = sbr.rel target = $region3
    $region8: #{tpu_custom_call.1} parent=1 // loop_exit
      _
    %458 = vsyncpa [#allocation3], 1
    %s459 = scalar_lea.sflag [#allocation3], 1
    %460 = vsyncpa %s459, 1
    %461 = vsyncpa [#allocation4], 1
    %s462 = scalar_lea.sflag [#allocation4], 1
    %463 = vsyncpa %s462, 1

</llo_original>
